<compile_context>
chip_gen: v7x
topology: tpu7x:2x2x1
jax: 0.10.0
libtpu: 0.0.40
codegen_flags: <defaults>
</compile_context>

<pallas_src>
import jax
import jax.numpy as jnp
from jax.experimental import pallas as pl
from jax.experimental.pallas import tpu as pltpu

N_ROWS = 8
N_COLS = 16

_TM_MAX = 256   # sublane tile cap for c (multiple of 8)
_TN_MAX = 512   # lane tile cap for c (multiple of 128; wide tiles keep HBM streaming efficient)


def _loss_kernel(inv_alpha_ref, pqxy_ref, xcol_ref, yrow_ref, c_ref,
                 out_ref, acc_ref):
    i = pl.program_id(0)
    j = pl.program_id(1)
    first = jnp.logical_and(i == 0, j == 0)
    last = jnp.logical_and(i == pl.num_programs(0) - 1,
                           j == pl.num_programs(1) - 1)

    @pl.when(first)
    def _init():
        acc_ref[0] = jnp.float32(0.0)

    # sum over this (tm, tn) tile of relu(x_i + y_j - c_ij)^2 (f32 accumulate).
    m = xcol_ref[...] + yrow_ref[...] - c_ref[...]
    r = jnp.maximum(m, jnp.float32(0.0))
    acc_ref[0] += jnp.sum(r * r)

    @pl.when(last)
    def _finalize():
        # -sum(x*p) - sum(y*q) == -sum(concat(x,y) * concat(p,q)).
        # The stacked (2, n_rows+n_cols) operand is resident at every grid step
        # (its block index is always (0, 0)).
        dot_xy_pq = jnp.sum(pqxy_ref[0:1, :] * pqxy_ref[1:2, :])
        out_ref[0] = inv_alpha_ref[0] * acc_ref[0] - dot_xy_pq


def _pick_tile(dim, max_tile, align):
    """Largest tile <= max_tile that is a multiple of `align` and divides `dim`."""
    if dim <= max_tile:
        return dim
    t = (max_tile // align) * align
    while t >= align:
        if dim % t == 0:
            return t
        t -= align
    # TODO(synk): ragged dims need in-kernel edge masking; fall back to one block.
    return dim


def _f32(a):
    return a if a.dtype == jnp.float32 else a.astype(jnp.float32)


def loss_forward(x, y, p, q, c, alpha):
    """x:(1,n_rows) y:(1,n_cols) p:(1,n_rows) q:(1,n_cols) c:(n_rows,n_cols).
    alpha may be a Python scalar or a traced JAX scalar (no recompile per value)."""
    n_rows, n_cols = c.shape
    x, y, p, q, c = _f32(x), _f32(y), _f32(p), _f32(q), _f32(c)

    # One lane-dense operand carrying p,q (row 0) and x,y (row 1).
    pqxy = jnp.stack([jnp.concatenate([p[0], q[0]]),
                      jnp.concatenate([x[0], y[0]])], axis=0)
    x_col = x.reshape(n_rows, 1)          # row-broadcast operand for c tiles
    y_row = y                             # col-broadcast operand for c tiles
    inv_alpha = (jnp.float32(0.5) / jnp.asarray(alpha, dtype=jnp.float32)).reshape(1)

    tm = _pick_tile(n_rows, _TM_MAX, 8)
    tn = _pick_tile(n_cols, _TN_MAX, 128)
    grid = (n_rows // tm, n_cols // tn)

    cost = pl.CostEstimate(
        flops=3 * n_rows * n_cols + 2 * (n_rows + n_cols),
        bytes_accessed=4 * (n_rows * n_cols + 3 * (n_rows + n_cols) + 2),
        transcendentals=0,
    )

    out = pl.pallas_call(
        _loss_kernel,
        out_shape=jax.ShapeDtypeStruct((1,), jnp.float32),
        grid_spec=pltpu.PrefetchScalarGridSpec(
            num_scalar_prefetch=0,
            grid=grid,
            in_specs=[
                pl.BlockSpec(memory_space=pltpu.MemorySpace.SMEM),        # 0.5/alpha
                pl.BlockSpec((2, n_rows + n_cols), lambda i, j: (0, 0)),  # [p,q ; x,y]
                pl.BlockSpec((tm, 1), lambda i, j: (i, 0)),               # x as column
                pl.BlockSpec((1, tn), lambda i, j: (0, j)),               # y as row
                pl.BlockSpec((tm, tn), lambda i, j: (i, j)),              # c tile
            ],
            out_specs=pl.BlockSpec(memory_space=pltpu.MemorySpace.SMEM),
            scratch_shapes=[pltpu.SMEM((1,), jnp.float32)],
        ),
        compiler_params=pltpu.CompilerParams(
            dimension_semantics=("arbitrary", "arbitrary")),
        cost_estimate=cost,
    )(inv_alpha, pqxy, x_col, y_row, c)
    return out[0]


def _reference(x, y, p, q, c, alpha):
    out = -jnp.sum(x * p) - jnp.sum(y * q)
    m = x.reshape(-1, 1) + y - c
    return out + 0.5 / alpha * jnp.sum(jnp.square(jnp.maximum(m, 0.0)))


if __name__ == "__main__":
    key = jax.random.PRNGKey(0)
    kp, kq, kc = jax.random.split(key, 3)
    p = jax.random.normal(kp, (1, N_ROWS), dtype=jnp.float32)
    q = jax.random.normal(kq, (1, N_COLS), dtype=jnp.float32)
    c = jax.random.normal(kc, (N_ROWS, N_COLS), dtype=jnp.float32)
    # LossModule parameter init: ones/N  (passed as inputs so the kernel stays
    # valid when L-BFGS updates them).
    x = jnp.full((1, N_ROWS), 1.0 / N_ROWS, dtype=jnp.float32)
    y = jnp.full((1, N_COLS), 1.0 / N_COLS, dtype=jnp.float32)
    alpha = 0.5

    out = loss_forward(x, y, p, q, c, alpha)
    jax.block_until_ready(out)

    ref = _reference(x, y, p, q, c, alpha)
    assert jnp.allclose(out, ref, rtol=1e-5, atol=1e-5), (out, ref)
    print("KERNEL_OK")
</pallas_src>

<mosaic_0001>
module attributes {stable_mosaic.version = 11 : i64} {
  func.func @_loss_kernel(%arg0: i32, %arg1: i32, %arg2: memref<1xf32, #tpu.memory_space<smem>>, %arg3: memref<2x24xf32, #tpu.memory_space<vmem>>, %arg4: memref<8x1xf32, #tpu.memory_space<vmem>>, %arg5: memref<1x16xf32, #tpu.memory_space<vmem>>, %arg6: memref<8x16xf32, #tpu.memory_space<vmem>>, %arg7: memref<1xf32, #tpu.memory_space<smem>>, %arg8: memref<1xf32, #tpu.memory_space<smem>>) attributes {dimension_semantics = [#tpu.dimension_semantics<arbitrary>, #tpu.dimension_semantics<arbitrary>], iteration_bounds = array<i64: 1, 1>, scalar_prefetch = 0 : i64, scratch_operands = 1 : i64, tpu.core_type = #tpu.core_type<tc>, window_params = [{transform_indices = @transform_0, window_bounds = array<i64: 1>}, {pipeline_mode = #tpu.pipeline_mode<synchronous>, transform_indices = @transform_1, window_bounds = array<i64: 2, 24>}, {transform_indices = @transform_2, window_bounds = array<i64: 8, 1>}, {transform_indices = @transform_3, window_bounds = array<i64: 1, 16>}, {transform_indices = @transform_4, window_bounds = array<i64: 8, 16>}, {transform_indices = @transform_5, window_bounds = array<i64: 1>}]} {
    %c0_i32 = arith.constant 0 : i32
    %0 = arith.cmpi eq, %arg0, %c0_i32 : i32
    %c0_i32_0 = arith.constant 0 : i32
    %1 = arith.cmpi eq, %arg1, %c0_i32_0 : i32
    %2 = arith.andi %0, %1 : i1
    %c0_i32_1 = arith.constant 0 : i32
    %3 = arith.cmpi eq, %arg0, %c0_i32_1 : i32
    %c0_i32_2 = arith.constant 0 : i32
    %4 = arith.cmpi eq, %arg1, %c0_i32_2 : i32
    %5 = arith.andi %3, %4 : i1
    %6 = arith.extui %2 : i1 to i32
    %c0_i32_3 = arith.constant 0 : i32
    %7 = arith.cmpi ne, %6, %c0_i32_3 : i32
    scf.if %7 {
      %cst_13 = arith.constant 0.000000e+00 : f32
      %c0_14 = arith.constant 0 : index
      %27 = memref.load %arg8[%c0_14] : memref<1xf32, #tpu.memory_space<smem>>
      memref.store %cst_13, %arg8[%c0_14] : memref<1xf32, #tpu.memory_space<smem>>
    } else {
    }
    %c0 = arith.constant 0 : index
    %c0_4 = arith.constant 0 : index
    %8 = vector.load %arg4[%c0, %c0_4] : memref<8x1xf32, #tpu.memory_space<vmem>>, vector<8x1xf32>
    %c0_5 = arith.constant 0 : index
    %c0_6 = arith.constant 0 : index
    %9 = vector.load %arg5[%c0_5, %c0_6] : memref<1x16xf32, #tpu.memory_space<vmem>>, vector<1x16xf32>
    %10 = vector.broadcast %8 : vector<8x1xf32> to vector<8x16xf32>
    %11 = vector.broadcast %9 : vector<1x16xf32> to vector<8x16xf32>
    %12 = arith.addf %10, %11 : vector<8x16xf32>
    %c0_7 = arith.constant 0 : index
    %c0_8 = arith.constant 0 : index
    %13 = vector.load %arg6[%c0_7, %c0_8] : memref<8x16xf32, #tpu.memory_space<vmem>>, vector<8x16xf32>
    %14 = arith.subf %12, %13 : vector<8x16xf32>
    %cst = arith.constant 0.000000e+00 : f32
    %15 = vector.broadcast %cst : f32 to vector<8x16xf32>
    %16 = arith.maximumf %14, %15 : vector<8x16xf32>
    %c0_9 = arith.constant 0 : index
    %17 = memref.load %arg8[%c0_9] : memref<1xf32, #tpu.memory_space<smem>>
    %18 = arith.mulf %16, %16 : vector<8x16xf32>
    %19 = vector.shape_cast %18 : vector<8x16xf32> to vector<1x8x16xf32>
    %cst_10 = arith.constant dense<0.000000e+00> : vector<1xf32>
    %20 = vector.multi_reduction <add>, %19, %cst_10 [1, 2] : vector<1x8x16xf32> to vector<1xf32>
    %21 = vector.shape_cast %20 : vector<1xf32> to vector<1x1x1xf32>
    %22 = vector.extract %21[0, 0, 0] : f32 from vector<1x1x1xf32>
    %23 = arith.addf %17, %22 : f32
    %c0_11 = arith.constant 0 : index
    %24 = memref.load %arg8[%c0_11] : memref<1xf32, #tpu.memory_space<smem>>
    memref.store %23, %arg8[%c0_11] : memref<1xf32, #tpu.memory_space<smem>>
    %25 = arith.extui %5 : i1 to i32
    %c0_i32_12 = arith.constant 0 : i32
    %26 = arith.cmpi ne, %25, %c0_i32_12 : i32
    scf.if %26 {
      %c0_13 = arith.constant 0 : index
      %c0_14 = arith.constant 0 : index
      %27 = vector.load %arg3[%c0_13, %c0_14] : memref<2x24xf32, #tpu.memory_space<vmem>>, vector<1x24xf32>
      %c1 = arith.constant 1 : index
      %c0_15 = arith.constant 0 : index
      %28 = vector.load %arg3[%c1, %c0_15] : memref<2x24xf32, #tpu.memory_space<vmem>>, vector<1x24xf32>
      %29 = arith.mulf %27, %28 : vector<1x24xf32>
      %30 = vector.shape_cast %29 : vector<1x24xf32> to vector<1x1x24xf32>
      %cst_16 = arith.constant dense<0.000000e+00> : vector<1xf32>
      %31 = vector.multi_reduction <add>, %30, %cst_16 [1, 2] : vector<1x1x24xf32> to vector<1xf32>
      %32 = vector.shape_cast %31 : vector<1xf32> to vector<1x1x1xf32>
      %33 = vector.extract %32[0, 0, 0] : f32 from vector<1x1x1xf32>
      %c0_17 = arith.constant 0 : index
      %34 = memref.load %arg2[%c0_17] : memref<1xf32, #tpu.memory_space<smem>>
      %c0_18 = arith.constant 0 : index
      %35 = memref.load %arg8[%c0_18] : memref<1xf32, #tpu.memory_space<smem>>
      %36 = arith.mulf %34, %35 : f32
      %37 = arith.subf %36, %33 : f32
      %c0_19 = arith.constant 0 : index
      %38 = memref.load %arg7[%c0_19] : memref<1xf32, #tpu.memory_space<smem>>
      memref.store %37, %arg7[%c0_19] : memref<1xf32, #tpu.memory_space<smem>>
    } else {
    }
    return
  }
  func.func @transform_0(%arg0: i32, %arg1: i32) -> i32 {
    %c0_i32 = arith.constant 0 : i32
    %c0_i32_0 = arith.constant 0 : i32
    return %c0_i32 : i32
  }
  func.func @transform_1(%arg0: i32, %arg1: i32) -> (i32, i32) {
    %c0_i32 = arith.constant 0 : i32
    %c0_i32_0 = arith.constant 0 : i32
    %c0_i32_1 = arith.constant 0 : i32
    return %c0_i32, %c0_i32_0 : i32, i32
  }
  func.func @transform_2(%arg0: i32, %arg1: i32) -> (i32, i32) {
    %c0_i32 = arith.constant 0 : i32
    %c0_i32_0 = arith.constant 0 : i32
    return %arg0, %c0_i32 : i32, i32
  }
  func.func @transform_3(%arg0: i32, %arg1: i32) -> (i32, i32) {
    %c0_i32 = arith.constant 0 : i32
    %c0_i32_0 = arith.constant 0 : i32
    return %c0_i32, %arg1 : i32, i32
  }
  func.func @transform_4(%arg0: i32, %arg1: i32) -> (i32, i32) {
    %c0_i32 = arith.constant 0 : i32
    return %arg0, %arg1 : i32, i32
  }
  func.func @transform_5(%arg0: i32, %arg1: i32) -> i32 {
    %c0_i32 = arith.constant 0 : i32
    %c0_i32_0 = arith.constant 0 : i32
    return %c0_i32 : i32
  }
}

</mosaic_0001>

<llo_original>
// kernel: tpu_custom_call.1
$region0: #{tpu_custom_call.1}
  #allocation0 [shape = 'u32[]', space=smem, size = 0x4, offset = 0x4, fixed_abs, tag = 'smem constant byte address 0x4 - core index']
  #allocation1 [shape = 'u32[144,128]{1,0:T(1,128)}', space=vmem, size = 0x12000, scoped, tag = 'internal scratch']
  #allocation2 [shape = 'f32[1]{0:T(128)}', space=smem, size = 0x200, scoped, tag = 'scratch operand']
  #allocation3 [shape = 'f32[1]{0:T(128)S(6)}', space=smem, size = 0x200, scoped, tag = 'scoped memory for tpu_custom_call.1']
  %s0 = inlined_call_operand.<no memory space> [shape: f32[1], index: 0, kind: input, shape index: {}]
  %s1 = inlined_call_operand.vmem [shape: f32[2,24], index: 1, kind: input, shape index: {}]
  %s2 = inlined_call_operand.vmem [shape: f32[8,1], index: 2, kind: input, shape index: {}]
  %s3 = inlined_call_operand.vmem [shape: f32[1,16], index: 3, kind: input, shape index: {}]
  %s4 = inlined_call_operand.vmem [shape: f32[8,16], index: 4, kind: input, shape index: {}]
  %s5 = inlined_call_operand.hbm [shape: f32[1], index: 5, kind: output, shape index: {}]
  %s6 = sld [smem:[#allocation0]]
  $region38: #{tpu_custom_call.1} parent=0
    _
  %s8 = ssub.s32 1, %s6
  %s9 = scalar_select 0, %s8, %s6
  %10 = sst [smem:[#allocation3]] %s0
  $region1: #{tpu_custom_call.1} parent=0
    #allocation4 [shape = 'u8[512]{0}', space=smem, size = 0x200, scoped, tag = 'output window, operand 0, single buffered']
    #allocation5 [shape = 's32[1]{0}', space=sflag, size = 0x4, scoped, tag = 'scoped memory for tpu_custom_call.1']
    %11 = vsyncpa [#allocation5], 0
    // Predicated region
    $region2: #{tpu_custom_call.1} parent=1 // pred_check
      _
    $region3: #{tpu_custom_call.1} parent=1 // pred_check_branch
      %13 = sbr.rel (0) target = $region5
    $region4: #{tpu_custom_call.1} parent=1 // pred_region
      _
    $region5: #{tpu_custom_call.1} parent=1 // pred_fallthru
      _
    // Predicated region
    $region6: #{tpu_custom_call.1} parent=1 // pred_check
      _
    $region7: #{tpu_custom_call.1} parent=1 // pred_check_branch
      %15 = sbr.rel (0) target = $region9
    $region8: #{tpu_custom_call.1} parent=1 // pred_region
      _
    $region9: #{tpu_custom_call.1} parent=1 // pred_fallthru
      _
    // Predicated region
    $region10: #{tpu_custom_call.1} parent=1 // pred_check
      _
    $region11: #{tpu_custom_call.1} parent=1 // pred_check_branch
      %17 = sbr.rel (0) target = $region13
    $region12: #{tpu_custom_call.1} parent=1 // pred_region
      _
    $region13: #{tpu_custom_call.1} parent=1 // pred_fallthru
      _
    // Predicated region
    $region14: #{tpu_custom_call.1} parent=1 // pred_check
      _
    $region15: #{tpu_custom_call.1} parent=1 // pred_check_branch
      %19 = sbr.rel (0) target = $region17
    $region16: #{tpu_custom_call.1} parent=1 // pred_region
      _
    $region17: #{tpu_custom_call.1} parent=1 // pred_fallthru
      _
    // Predicated region
    $region18: #{tpu_custom_call.1} parent=1 // pred_check
      _
    $region19: #{tpu_custom_call.1} parent=1 // pred_check_branch
      %21 = sbr.rel (0) target = $region21
    $region20: #{tpu_custom_call.1} parent=1 // pred_region
      _
    $region21: #{tpu_custom_call.1} parent=1 // pred_fallthru
      _
    %p22 = scmp.eq.s32.totalorder 0, 0
    %p23 = scmp.eq.s32.totalorder 0, 0
    %p24 = pnand %p22, %p23
    %p25 = pneg %p24
    // Predicated region
    $region22: #{tpu_custom_call.1} parent=1 // pred_check
      _
    $region23: #{tpu_custom_call.1} parent=1 // pred_check_branch
      %27 = sbr.rel (%p24) target = $region25
    $region24: #{tpu_custom_call.1} parent=1 // pred_region
      %s28 = scalar_lea.smem [#allocation2], 0
      %29 = sst [smem:[%s28]] 0.0
    $region25: #{tpu_custom_call.1} parent=1 // pred_fallthru
      _
    %v30 = vld [vmem:[%s2] sm:$0xff]
    %v31 = vld [vmem:[%s3] sm:$0x1]
    %33 = vset.pattern.permute.xlu0 0
    %34 = vperm.xlu0 %33, %v30
    %v35 = vpop.permute.xlu0 %34
    %v38 = vlaneseq
    %v39 = vshrl.u32 %v38, 7
    %v40 = vsub.s32 0, %v39
    %v41 = vrot.slane %v31, %v40
    %v43 = vadd.f32 %v35, %v41
    %v44 = vld [vmem:[%s4] sm:$0xff]
    %v45 = vsub.f32 %v43, %v44
    %v46 = vmax.f32 %v45, 0.0
    %s47 = sld [smem:[#allocation2]]
    %v48 = vmul.f32 %v46, %v46
    %vm49 = vcmask 130048
    %v50 = vsel %vm49, %v48, 0.0
    %51 = vadd.xlane.f32.xlu0 %v50
    %v52 = vpop.xlane.xlu0 %51
    %v53 = vrot.slane %v52, 4
    %v54 = vadd.f32 %v52, %v53
    %v55 = vrot.slane %v54, 2
    %v56 = vadd.f32 %v54, %v55
    %v57 = vrot.slane %v56, 1
    %v58 = vadd.f32 %v56, %v57
    %s59 = vtos %v58
    %s60 = sadd.f32 %s47, %s59
    %s61 = scalar_lea.smem [#allocation2], 0
    %62 = sst [smem:[%s61]] %s60
    // Predicated region
    $region26: #{tpu_custom_call.1} parent=1 // pred_check
      _
    $region27: #{tpu_custom_call.1} parent=1 // pred_check_branch
      %64 = sbr.rel (%p24) target = $region29
    $region28: #{tpu_custom_call.1} parent=1 // pred_region
      %v65 = vld [vmem:[%s1] sm:$0x1]
      %v66 = vld [vmem:[%s1 + $0x1] sm:$0x1]
      %v67 = vmul.f32 %v65, %v66
      %vm68 = vcmask 188416
      %v69 = vsel %vm68, %v67, 0.0
      %70 = vadd.xlane.f32.xlu0 %v69
      %v71 = vpop.xlane.xlu0 %70
      %v72 = vrot.slane %v71, 4
      %v73 = vadd.f32 %v71, %v72
      %v74 = vrot.slane %v73, 2
      %v75 = vadd.f32 %v73, %v74
      %v76 = vrot.slane %v75, 1
      %v77 = vadd.f32 %v75, %v76
      %s78 = vtos %v77
      %s79 = sld [smem:[#allocation3]]
      %s80 = sld [smem:[#allocation2]]
      %s81 = smul.f32 %s79, %s80
      %s82 = ssub.f32 %s81, %s78
      %s83 = scalar_lea.smem [#allocation4], 0
      %84 = sst [smem:[%s83]] %s82
    $region29: #{tpu_custom_call.1} parent=1 // pred_fallthru
      _
    // Predicated region
    $region30: #{tpu_custom_call.1} parent=1 // pred_check
      _
    $region31: #{tpu_custom_call.1} parent=1 // pred_check_branch
      %86 = sbr.rel (0) target = $region33
    $region32: #{tpu_custom_call.1} parent=1 // pred_region
      %s88 = ssub.s32 16, 16
      %89 = vsyncadd [#allocation5], %s88
      %92 = dma.smem_to_hbm [#allocation4], 16, %s5, [#allocation5]
    $region33: #{tpu_custom_call.1} parent=1 // pred_fallthru
      _
    // Predicated region
    $region34: #{tpu_custom_call.1} parent=1 // pred_check
      _
    $region35: #{tpu_custom_call.1} parent=1 // pred_check_branch
      %94 = sbr.rel (0) target = $region37
    $region36: #{tpu_custom_call.1} parent=1 // pred_region
      %95 = dma.done [#allocation5], 16
    $region37: #{tpu_custom_call.1} parent=1 // pred_fallthru
      _
    %96 = sfence
    %97 = vsyncpa [#allocation5], 1

</llo_original>
